<compile_context>
chip_gen: v7x
topology: tpu7x:2x2x1
jax: 0.10.0
libtpu: 0.0.40
codegen_flags: <defaults>
</compile_context>

<pallas_src>
import numpy as np
import jax
import jax.numpy as jnp
from jax.experimental import pallas as pl
from jax.experimental.pallas import tpu as pltpu


def _penc_kernel(a_ref, w_ref, o_ref):
    # a_ref: (TX, K)    per-x table [emb_x truncated to C | ones], K = pad(C+1, 8)
    # w_ref: (K, Y*C)   one-hot lane-tiling rows + flattened emb_y row
    # o_ref: (TX, Y*C)  lane-dense output slab for TX x-rows
    o_ref[...] = jnp.dot(
        a_ref[...], w_ref[...], preferred_element_type=jnp.float32
    ).astype(o_ref.dtype)


def _build_tables(X, Y, orig_ch):
    """Host-side (numpy) construction of the tiny constant operands A, W."""
    channels = int(np.ceil(orig_ch / 4) * 2)  # even, 2*channels >= orig_ch
    inv_freq = 1.0 / 10000.0 ** (
        np.arange(0, channels, 2, dtype=np.float32) / np.float32(channels)
    )

    def interleaved(pos):  # sin/cos interleave, matches get_emb()
        s = np.einsum("i,j->ij", pos, inv_freq)
        return np.stack((np.sin(s), np.cos(s)), axis=-1).reshape(pos.shape[0], -1)

    emb_x = interleaved(np.arange(X, dtype=np.float32))  # (X, channels)
    emb_y = interleaved(np.arange(Y, dtype=np.float32))  # (Y, channels)

    C = orig_ch
    # Per-axis tables over the C output channels (x-half first, then y-half,
    # truncated to C exactly like emb[..., :orig_ch] in the module).
    xtab = np.zeros((X, C), np.float32)
    ytab = np.zeros((Y, C), np.float32)
    nx = min(channels, C)
    xtab[:, :nx] = emb_x[:, :nx]
    if C > channels:
        ny = min(channels, C - channels)
        ytab[:, channels:channels + ny] = emb_y[:, :ny]

    K = C + 1
    K8 = int(np.ceil(K / 8) * 8)  # pad contraction dim to a sublane multiple

    A = np.zeros((X, K8), np.float32)
    A[:, :C] = xtab
    A[:, C] = 1.0

    W = np.zeros((K8, Y * C), np.float32)
    for c in range(C):
        W[c, c::C] = 1.0            # out[., y*C+c] += xtab[., c]  (lane tiling)
    W[C, :] = ytab.reshape(-1)      # out[., y*C+c] += ytab[y, c]
    return A, W


def positional_encoding_2d(tensor):
    """Positional-encoding matrix with the same shape/dtype as `tensor`.

    tensor: (batch, x, y, ch) channels-last, matching the PyTorch module.
    """
    if tensor.ndim != 4:
        raise RuntimeError("The input tensor has to be 4d!")
    B, X, Y, C = tensor.shape
    YC = Y * C

    A_np, W_np = _build_tables(X, Y, C)
    K8 = A_np.shape[1]

    # X-tile sized so each output block stays ~2 MiB (x2 for double buffering)
    # -> comfortably inside the default scoped-VMEM budget on v5e/v6e/v7x.
    bytes_per_row = YC * max(int(np.dtype(tensor.dtype).itemsize), 4)
    tx = min(X, max(1, (2 * 1024 * 1024) // bytes_per_row))
    if X >= 8:
        tx = max(8, (tx // 8) * 8)   # keep sublane-aligned tiles
    grid = (pl.cdiv(X, tx),)

    A = jnp.asarray(A_np)
    W = jnp.asarray(W_np)

    flat = pl.pallas_call(
        _penc_kernel,
        out_shape=jax.ShapeDtypeStruct((X, YC), tensor.dtype),
        grid_spec=pltpu.PrefetchScalarGridSpec(
            num_scalar_prefetch=0,
            grid=grid,
            in_specs=[
                pl.BlockSpec((tx, K8), lambda i: (i, 0)),
                pl.BlockSpec((K8, YC), lambda i: (0, 0)),
            ],
            out_specs=pl.BlockSpec((tx, YC), lambda i: (i, 0)),
        ),
        compiler_params=pltpu.CompilerParams(
            dimension_semantics=("parallel",),  # independent tiles -> both TCs on v7x
        ),
    )(A, W)

    # (X, Y*C) -> (X, Y, C) is a free contiguous reshape; the encoding is
    # batch-invariant, so broadcast over B instead of recomputing B times.
    return jnp.broadcast_to(flat.reshape(X, Y, C)[None], (B, X, Y, C))


def _reference_numpy(tensor_shape):
    """Pure-numpy replica of the PyTorch forward for verification."""
    B, X, Y, orig_ch = tensor_shape
    channels = int(np.ceil(orig_ch / 4) * 2)
    inv_freq = 1.0 / 10000.0 ** (
        np.arange(0, channels, 2, dtype=np.float32) / np.float32(channels)
    )
    pos_x = np.arange(X, dtype=np.float32)
    pos_y = np.arange(Y, dtype=np.float32)
    sin_inp_x = np.einsum("i,j->ij", pos_x, inv_freq)
    sin_inp_y = np.einsum("i,j->ij", pos_y, inv_freq)

    def get_emb(s):
        return np.stack((np.sin(s), np.cos(s)), axis=-1).reshape(s.shape[0], -1)

    emb_x = get_emb(sin_inp_x)[:, None, :]
    emb_y = get_emb(sin_inp_y)
    emb = np.zeros((X, Y, 2 * channels), dtype=np.float32)
    emb[:, :, :channels] = emb_x
    emb[:, :, channels:2 * channels] = emb_y
    return np.broadcast_to(emb[None, :, :, :orig_ch], (B, X, Y, orig_ch))


if __name__ == "__main__":
    key = jax.random.PRNGKey(0)
    B, X, Y, C = 2, 16, 16, 6   # channels-last: (batch, x, y, ch)
    x_in = jax.random.normal(key, (B, X, Y, C), dtype=jnp.float32)

    out = jax.block_until_ready(positional_encoding_2d(x_in))

    ref = _reference_numpy((B, X, Y, C))
    assert out.shape == x_in.shape and out.dtype == x_in.dtype
    np.testing.assert_allclose(np.asarray(out), ref, atol=1e-5, rtol=1e-5)

    print("KERNEL_OK")
</pallas_src>

<mosaic_0001>
module attributes {stable_mosaic.version = 11 : i64} {
  func.func @_penc_kernel(%arg0: i32, %arg1: memref<16x8xf32, #tpu.memory_space<vmem>>, %arg2: memref<8x96xf32, #tpu.memory_space<vmem>>, %arg3: memref<16x96xf32, #tpu.memory_space<vmem>>) attributes {dimension_semantics = [#tpu.dimension_semantics<parallel>], iteration_bounds = array<i64: 1>, scalar_prefetch = 0 : i64, scratch_operands = 0 : i64, tpu.core_type = #tpu.core_type<tc>, window_params = [{transform_indices = @transform_0, window_bounds = array<i64: 16, 8>}, {pipeline_mode = #tpu.pipeline_mode<synchronous>, transform_indices = @transform_1, window_bounds = array<i64: 8, 96>}, {transform_indices = @transform_2, window_bounds = array<i64: 16, 96>}]} {
    %c0 = arith.constant 0 : index
    %c0_0 = arith.constant 0 : index
    %0 = vector.load %arg1[%c0, %c0_0] : memref<16x8xf32, #tpu.memory_space<vmem>>, vector<16x8xf32>
    %c0_1 = arith.constant 0 : index
    %c0_2 = arith.constant 0 : index
    %1 = vector.load %arg2[%c0_1, %c0_2] : memref<8x96xf32, #tpu.memory_space<vmem>>, vector<8x96xf32>
    %cst = arith.constant dense<0.000000e+00> : vector<16x96xf32>
    %2 = tpu.matmul %0, %1, %cst {dimension_numbers = #tpu.dot_dimension_numbers<[1], [0], [0], [1], [0, 0, 1, 1], [], []>} : vector<16x8xf32>, vector<8x96xf32>, vector<16x96xf32> -> vector<16x96xf32>
    %c0_3 = arith.constant 0 : index
    %c0_4 = arith.constant 0 : index
    %3 = vector.load %arg3[%c0_3, %c0_4] : memref<16x96xf32, #tpu.memory_space<vmem>>, vector<16x96xf32>
    tpu.vector_store %arg3[%c0_3, %c0_4], %2 {strides = array<i32>} : memref<16x96xf32, #tpu.memory_space<vmem>>, vector<16x96xf32>,
    return
  }
  func.func @transform_0(%arg0: i32) -> (i32, i32) {
    %c0_i32 = arith.constant 0 : i32
    %c0_i32_0 = arith.constant 0 : i32
    return %arg0, %c0_i32 : i32, i32
  }
  func.func @transform_1(%arg0: i32) -> (i32, i32) {
    %c0_i32 = arith.constant 0 : i32
    %c0_i32_0 = arith.constant 0 : i32
    %c0_i32_1 = arith.constant 0 : i32
    return %c0_i32, %c0_i32_0 : i32, i32
  }
  func.func @transform_2(%arg0: i32) -> (i32, i32) {
    %c0_i32 = arith.constant 0 : i32
    %c0_i32_0 = arith.constant 0 : i32
    return %arg0, %c0_i32 : i32, i32
  }
}

</mosaic_0001>

<llo_original>
// kernel: tpu_custom_call.1
$region0: #{tpu_custom_call.1}
  #allocation0 [shape = 'u32[]', space=smem, size = 0x4, offset = 0x4, fixed_abs, tag = 'smem constant byte address 0x4 - core index']
  #allocation1 [shape = 'u32[144,128]{1,0:T(1,128)}', space=vmem, size = 0x12000, scoped, tag = 'internal scratch']
  %s0 = inlined_call_operand.vmem [shape: f32[16,8], index: 0, kind: input, shape index: {}]
  %s1 = inlined_call_operand.vmem [shape: f32[8,96], index: 1, kind: input, shape index: {}]
  %s2 = inlined_call_operand.hbm [shape: f32[16,96], index: 2, kind: output, shape index: {}]
  %s3 = sld [smem:[#allocation0]]
  $region18: #{tpu_custom_call.1} parent=0
    _
  %s5 = ssub.s32 1, %s3
  %s6 = scalar_select 0, %s5, %s3
  $region1: #{tpu_custom_call.1} parent=0
    #allocation2 [shape = 'u8[8192]{0}', space=vmem, size = 0x2000, scoped, tag = 'output window, operand 0, single buffered']
    #allocation3 [shape = 's32[1]{0}', space=sflag, size = 0x4, scoped, tag = 'scoped memory for tpu_custom_call.1']
    %7 = vsyncpa [#allocation3], 0
    // Predicated region
    $region2: #{tpu_custom_call.1} parent=1 // pred_check
      _
    $region3: #{tpu_custom_call.1} parent=1 // pred_check_branch
      %9 = sbr.rel (0) target = $region5
    $region4: #{tpu_custom_call.1} parent=1 // pred_region
      _
    $region5: #{tpu_custom_call.1} parent=1 // pred_fallthru
      _
    // Predicated region
    $region6: #{tpu_custom_call.1} parent=1 // pred_check
      _
    $region7: #{tpu_custom_call.1} parent=1 // pred_check_branch
      %11 = sbr.rel (0) target = $region9
    $region8: #{tpu_custom_call.1} parent=1 // pred_region
      _
    $region9: #{tpu_custom_call.1} parent=1 // pred_fallthru
      _
    %v12 = vld [vmem:[%s0] sm:$0xff]
    %v13 = vld [vmem:[%s0 + $0x8] sm:$0xff]
    %v14 = vld [vmem:[%s1] sm:$0xff]
    %vm15 = vcmask 64512
    %v17 = vsel %vm15, %v12, 0
    %v20 = vsel %vm15, %v13, 0
    %22 = vmatprep.subr.mxu0 0.0
    %23 = vmatpush1.msra.mxu0 %v14
    %24 = vmatprep.subr.mxu0 0.0
    %25 = vmatpush1.msra.mxu0 0.0
    %26 = vmatprep.subr.mxu0 0.0
    %27 = vmatpush1.msra.mxu0 0.0
    %28 = vmatprep.subr.mxu0 0.0
    %29 = vmatpush1.msra.mxu0 0.0
    %30 = vmatprep.subr.mxu0 0.0
    %31 = vmatpush1.msra.mxu0 0.0
    %32 = vmatprep.subr.mxu0 0.0
    %33 = vmatpush1.msra.mxu0 0.0
    %34 = vmatprep.subr.mxu0 0.0
    %35 = vmatpush1.msra.mxu0 0.0
    %36 = vmatprep.subr.mxu0 0.0
    %37 = vmatpush1.msra.mxu0 0.0
    %38 = vmatprep.subr.mxu0 0.0
    %39 = vmatpush1.msra.mxu0 0.0
    %40 = vmatprep.subr.mxu0 0.0
    %41 = vmatpush1.msra.mxu0 0.0
    %42 = vmatprep.subr.mxu0 0.0
    %43 = vmatpush1.msra.mxu0 0.0
    %44 = vmatprep.subr.mxu0 0.0
    %45 = vmatpush1.msra.mxu0 0.0
    %46 = vmatprep.subr.mxu0 0.0
    %47 = vmatpush1.msra.mxu0 0.0
    %48 = vmatprep.subr.mxu0 0.0
    %49 = vmatpush1.msra.mxu0 0.0
    %50 = vmatprep.subr.mxu0 0.0
    %51 = vmatpush1.msra.mxu0 0.0
    %52 = vmatprep.subr.mxu0 0.0
    %53 = vmatpush1.msra.mxu0 0.0
    %54 = vmatprep.subr.mxu0 0.0
    %55 = vmatpush1.msra.mxu0 0.0
    %56 = vmatprep.subr.mxu0 0.0
    %57 = vmatpush1.msra.mxu0 0.0
    %58 = vmatprep.subr.mxu0 0.0
    %59 = vmatpush1.msra.mxu0 0.0
    %60 = vmatprep.subr.mxu0 0.0
    %61 = vmatpush1.msra.mxu0 0.0
    %62 = vmatprep.subr.mxu0 0.0
    %63 = vmatpush1.msra.mxu0 0.0
    %64 = vmatprep.subr.mxu0 0.0
    %65 = vmatpush1.msra.mxu0 0.0
    %66 = vmatprep.subr.mxu0 0.0
    %67 = vmatpush1.msra.mxu0 0.0
    %68 = vmatprep.subr.mxu0 0.0
    %69 = vmatpush1.msra.mxu0 0.0
    %70 = vmatprep.subr.mxu0 0.0
    %71 = vmatpush1.msra.mxu0 0.0
    %72 = vmatprep.subr.mxu0 0.0
    %73 = vmatpush1.msra.mxu0 0.0
    %74 = vmatprep.subr.mxu0 0.0
    %75 = vmatpush1.msra.mxu0 0.0
    %76 = vmatprep.subr.mxu0 0.0
    %77 = vmatpush1.msra.mxu0 0.0
    %78 = vmatprep.subr.mxu0 0.0
    %79 = vmatpush1.msra.mxu0 0.0
    %80 = vmatprep.subr.mxu0 0.0
    %81 = vmatpush1.msra.mxu0 0.0
    %82 = vmatprep.subr.mxu0 0.0
    %83 = vmatpush1.msra.mxu0 0.0
    %84 = vmatprep.subr.mxu0 0.0
    %85 = vmatpush1.msra.mxu0 0.0
    %86 = vmatprep.mubr.f32.mxu0 0.0
    %87 = vmatmul.mubr.f32.gmra.mrb[0].mxu0 %v17
    %v88 = vpop.f32.mrb[0].mxu0
    %v89 = vadd.f32 0.0, %v88
    %v90 = vpop.f32.mrb[0].mxu0
    %91 = vmatprep.mubr.f32.mxu0 0.0
    %92 = vmatmul.mubr.f32.gmra.mrb[0].mxu0 %v20
    %v93 = vpop.f32.mrb[0].mxu0
    %v94 = vadd.f32 0.0, %v93
    %v95 = vpop.f32.mrb[0].mxu0
    %96 = vdwg.mxu0
    %vm97 = vcmask 785408
    %98 = vst.msk [vmem:[#allocation2] sm:$0xff] %vm97, %v89
    %99 = vst.msk [vmem:[#allocation2 + $0x8] sm:$0xff] %vm97, %v94
    // Predicated region
    $region10: #{tpu_custom_call.1} parent=1 // pred_check
      _
    $region11: #{tpu_custom_call.1} parent=1 // pred_check_branch
      %101 = sbr.rel (0) target = $region13
    $region12: #{tpu_custom_call.1} parent=1 // pred_region
      %s103 = ssub.s32 256, 256
      %104 = vsyncadd [#allocation3], %s103
      %s105 = sshll.u32 [#allocation2], 4
      %s106 = int_to_ptr.vmem [resolvable:$true] %s105
      %111 = dma.vmem_to_hbm [thread:$0]  %s106, 256, %s2, [#allocation3], 128, 128, 8
    $region13: #{tpu_custom_call.1} parent=1 // pred_fallthru
      _
    // Predicated region
    $region14: #{tpu_custom_call.1} parent=1 // pred_check
      _
    $region15: #{tpu_custom_call.1} parent=1 // pred_check_branch
      %113 = sbr.rel (0) target = $region17
    $region16: #{tpu_custom_call.1} parent=1 // pred_region
      %114 = dma.done [#allocation3], 256
    $region17: #{tpu_custom_call.1} parent=1 // pred_fallthru
      _
    %115 = vsyncpa [#allocation3], 1

</llo_original>
